<compile_context>
chip_gen: v7x
topology: tpu7x:2x2x1
jax: 0.10.0
libtpu: 0.0.40
codegen_flags: <defaults>
</compile_context>

<pallas_src>
import math

import jax
import jax.numpy as jnp
from jax.experimental import pallas as pl
from jax.experimental.pallas import tpu as pltpu


def _round_up(v, m):
    return ((v + m - 1) // m) * m


def _pick_tile(n_p, cap):
    """Largest multiple of 128 that divides n_p and is <= cap (min 128)."""
    best = 128
    t = 128
    while t <= min(cap, n_p):
        if n_p % t == 0:
            best = t
        t += 128
    return best


# --------------------------------------------------------------------------
# Kernel A: support = x @ W   (row-tiled, lane-padded hidden dim)
# --------------------------------------------------------------------------
def _xw_kernel(x_ref, w_ref, s_ref):
    s_ref[...] = jnp.dot(
        x_ref[...], w_ref[...], preferred_element_type=jnp.float32
    ).astype(s_ref.dtype)


# --------------------------------------------------------------------------
# Kernel B: out = adj @ support + bias   (K-reduction grid, output-resident
# f32 accumulation directly in o_ref; optional VMEM-resident support)
# --------------------------------------------------------------------------
def _make_adj_kernel(tk, support_resident):
    def kernel(adj_ref, s_ref, b_ref, o_ref):
        k = pl.program_id(1)

        @pl.when(k == 0)
        def _init():
            o_ref[...] = jnp.zeros_like(o_ref)

        if support_resident:
            # Full support block resident in VMEM; slice the current k tile.
            s_blk = s_ref[pl.ds(pl.multiple_of(k * tk, 128), tk), :]
        else:
            s_blk = s_ref[...]

        o_ref[...] += jnp.dot(
            adj_ref[...], s_blk, preferred_element_type=jnp.float32
        )

        @pl.when(k == pl.num_programs(1) - 1)
        def _finalize():
            # Bias added once, in the finalize branch only.
            o_ref[...] += b_ref[...]

    return kernel


def gcn1_forward(
    x,
    adj,
    weight,
    bias,
    *,
    compute_dtype=jnp.float32,
    max_tk=1024,
    max_tm=256,
    support_resident_budget_bytes=12 * 1024 * 1024,
):
    """Pallas implementation of GCN1.forward(x, adj).

    compute_dtype : jnp.float32 (exact PyTorch semantics, default) or
                    jnp.bfloat16 (halves the dominant adj HBM stream;
                    accumulation stays f32).
    """
    n, nfeat = x.shape
    nhid = weight.shape[1]
    assert adj.shape == (n, n)
    assert weight.shape == (nfeat, nhid)
    assert bias.shape == (nhid,)

    cdt = jnp.dtype(compute_dtype)
    isz = cdt.itemsize

    # Lane-dense hidden dim; node dim padded to a multiple of 128.
    nhid_p = _round_up(nhid, 128)
    n_p = _round_up(n, 128)

    # adj contraction tile (contiguous lane dim of the adj DMA): big.
    tk = _pick_tile(n_p, max_tk)
    # Row tile: small enough that the "parallel" i axis has >= 2 tiles for
    # v7x's two TensorCores whenever N allows it.
    tm_cap = max_tm if (n_p // max_tm >= 2 or n_p <= 128) else 128
    tm = _pick_tile(n_p, tm_cap)

    # ---- inputs: skip pad/cast copies when unnecessary ---------------------
    if n_p == n and adj.dtype == cdt:
        adj_p = adj  # no N*N host-side copy
    else:
        adj_p = jnp.zeros((n_p, n_p), cdt).at[:n, :n].set(adj.astype(cdt))
    if n_p == n and x.dtype == cdt:
        x_p = x
    else:
        x_p = jnp.zeros((n_p, nfeat), cdt).at[:n, :].set(x.astype(cdt))
    if nhid_p == nhid and weight.dtype == cdt:
        w_p = weight
    else:
        w_p = jnp.zeros((nfeat, nhid_p), cdt).at[:, :nhid].set(weight.astype(cdt))
    b_p = (
        jnp.zeros((1, nhid_p), jnp.float32)
        .at[:, :nhid]
        .set(bias.reshape(1, nhid).astype(jnp.float32))
    )

    vmem_limit = 32 * 1024 * 1024  # safe on v5e/v6e (128 MiB) and v7x (64 MiB)

    # ---- support = x @ W ----------------------------------------------------
    support = pl.pallas_call(
        _xw_kernel,
        out_shape=jax.ShapeDtypeStruct((n_p, nhid_p), cdt),
        grid=(n_p // tm,),
        in_specs=[
            pl.BlockSpec((tm, nfeat), lambda i: (i, 0)),
            pl.BlockSpec((nfeat, nhid_p), lambda i: (0, 0)),
        ],
        out_specs=pl.BlockSpec((tm, nhid_p), lambda i: (i, 0)),
        compiler_params=pltpu.CompilerParams(
            dimension_semantics=("parallel",),
            vmem_limit_bytes=vmem_limit,
        ),
        cost_estimate=pl.CostEstimate(
            flops=2 * n_p * nfeat * nhid_p,
            transcendentals=0,
            bytes_accessed=isz * (n_p * nfeat + nfeat * nhid_p + n_p * nhid_p),
        ),
    )(x_p, w_p)

    # ---- out = adj @ support + bias  (tiled K-reduction) --------------------
    # support VMEM-resident across the row-tile axis when it fits (count 2x
    # for double-buffering); otherwise stream the (tk, nhid_p) slice per step.
    support_resident = 2 * n_p * nhid_p * isz <= support_resident_budget_bytes
    if support_resident:
        s_spec = pl.BlockSpec((n_p, nhid_p), lambda i, k: (0, 0))
        support_bytes = n_p * nhid_p * isz  # read once
    else:
        s_spec = pl.BlockSpec((tk, nhid_p), lambda i, k: (k, 0))
        support_bytes = (n_p // tm) * n_p * nhid_p * isz  # re-streamed per row tile

    out_p = pl.pallas_call(
        _make_adj_kernel(tk, support_resident),
        out_shape=jax.ShapeDtypeStruct((n_p, nhid_p), jnp.float32),
        grid=(n_p // tm, n_p // tk),
        in_specs=[
            pl.BlockSpec((tm, tk), lambda i, k: (i, k)),
            s_spec,
            pl.BlockSpec((1, nhid_p), lambda i, k: (0, 0)),
        ],
        out_specs=pl.BlockSpec((tm, nhid_p), lambda i, k: (i, 0)),
        compiler_params=pltpu.CompilerParams(
            dimension_semantics=("parallel", "arbitrary"),
            vmem_limit_bytes=vmem_limit,
        ),
        cost_estimate=pl.CostEstimate(
            flops=2 * n_p * n_p * nhid_p,
            transcendentals=0,
            bytes_accessed=isz * n_p * n_p
            + support_bytes
            + 4 * (nhid_p + n_p * nhid_p),
        ),
    )(adj_p, support, b_p)

    # Strip node-row and hidden-lane padding.
    return out_p[:n, :nhid]


def init_gcn1_params(key, nfeat, nhid1):
    """Deterministic init matching GraphConvolution.reset_parameters:
    uniform(-stdv, stdv) with stdv = 1/sqrt(out_features)."""
    stdv = 1.0 / math.sqrt(nhid1)
    k_w, k_b = jax.random.split(key)
    weight = jax.random.uniform(k_w, (nfeat, nhid1), jnp.float32, -stdv, stdv)
    bias = jax.random.uniform(k_b, (nhid1,), jnp.float32, -stdv, stdv)
    return weight, bias


if __name__ == "__main__":
    key = jax.random.PRNGKey(0)
    k_x, k_adj, k_param = jax.random.split(key, 3)

    # Small-but-real shapes: N large enough to exercise multiple row tiles
    # (tm=256 -> 2 "parallel" tiles) while adj (n % tk == 0, f32) is passed
    # straight through without a host-side pad copy.
    N, NFEAT, NHID1 = 512, 64, 16

    x = jax.random.normal(k_x, (N, NFEAT), jnp.float32)
    # Dense symmetric adjacency — semantics only require a dense [N, N]
    # matrix, which is what torch.mm(adj, support) consumes.
    a = jax.random.uniform(k_adj, (N, N), jnp.float32)
    adj = (a + a.T) * 0.5

    weight, bias = init_gcn1_params(k_param, NFEAT, NHID1)

    # Exact (f32) path — matches the PyTorch module.
    out = gcn1_forward(x, adj, weight, bias)
    jax.block_until_ready(out)

    # Reference check in plain JAX (same math as the PyTorch module).
    support_ref = jnp.dot(x, weight, precision=jax.lax.Precision.HIGHEST)
    ref = jnp.dot(adj, support_ref, precision=jax.lax.Precision.HIGHEST) + bias
    assert out.shape == (N, NHID1)
    assert jnp.allclose(out, ref, atol=1e-3, rtol=1e-3), float(
        jnp.max(jnp.abs(out - ref))
    )

    # bf16 option (halves the dominant adj HBM stream; f32 accumulation).
    out_bf16 = gcn1_forward(x, adj, weight, bias, compute_dtype=jnp.bfloat16)
    jax.block_until_ready(out_bf16)
    rel_err = float(jnp.max(jnp.abs(out_bf16 - ref)) / jnp.max(jnp.abs(ref)))
    assert rel_err < 5e-2, rel_err

    print("KERNEL_OK")
</pallas_src>

<mosaic_0001>
module attributes {stable_mosaic.version = 11 : i64} {
  func.func @_xw_kernel(%arg0: i32, %arg1: memref<256x64xf32, #tpu.memory_space<vmem>>, %arg2: memref<64x128xf32, #tpu.memory_space<vmem>>, %arg3: memref<256x128xf32, #tpu.memory_space<vmem>>) attributes {dimension_semantics = [#tpu.dimension_semantics<parallel>], iteration_bounds = array<i64: 2>, scalar_prefetch = 0 : i64, scratch_operands = 0 : i64, tpu.core_type = #tpu.core_type<tc>, window_params = [{transform_indices = @transform_0, window_bounds = array<i64: 256, 64>}, {pipeline_mode = #tpu.pipeline_mode<synchronous>, transform_indices = @transform_1, window_bounds = array<i64: 64, 128>}, {transform_indices = @transform_2, window_bounds = array<i64: 256, 128>}]} {
    %c0 = arith.constant 0 : index
    %c0_0 = arith.constant 0 : index
    %0 = vector.load %arg1[%c0, %c0_0] : memref<256x64xf32, #tpu.memory_space<vmem>>, vector<256x64xf32>
    %c0_1 = arith.constant 0 : index
    %c0_2 = arith.constant 0 : index
    %1 = vector.load %arg2[%c0_1, %c0_2] : memref<64x128xf32, #tpu.memory_space<vmem>>, vector<64x128xf32>
    %cst = arith.constant dense<0.000000e+00> : vector<256x128xf32>
    %2 = tpu.matmul %0, %1, %cst {dimension_numbers = #tpu.dot_dimension_numbers<[1], [0], [0], [1], [0, 0, 1, 1], [], []>} : vector<256x64xf32>, vector<64x128xf32>, vector<256x128xf32> -> vector<256x128xf32>
    %c0_3 = arith.constant 0 : index
    %c0_4 = arith.constant 0 : index
    %3 = vector.load %arg3[%c0_3, %c0_4] : memref<256x128xf32, #tpu.memory_space<vmem>>, vector<256x128xf32>
    tpu.vector_store %arg3[%c0_3, %c0_4], %2 {strides = array<i32>} : memref<256x128xf32, #tpu.memory_space<vmem>>, vector<256x128xf32>,
    return
  }
  func.func @transform_0(%arg0: i32) -> (i32, i32) {
    %c0_i32 = arith.constant 0 : i32
    %c0_i32_0 = arith.constant 0 : i32
    return %arg0, %c0_i32 : i32, i32
  }
  func.func @transform_1(%arg0: i32) -> (i32, i32) {
    %c0_i32 = arith.constant 0 : i32
    %c0_i32_0 = arith.constant 0 : i32
    %c0_i32_1 = arith.constant 0 : i32
    return %c0_i32, %c0_i32_0 : i32, i32
  }
  func.func @transform_2(%arg0: i32) -> (i32, i32) {
    %c0_i32 = arith.constant 0 : i32
    %c0_i32_0 = arith.constant 0 : i32
    return %arg0, %c0_i32 : i32, i32
  }
}

</mosaic_0001>

<llo_original>
// kernel: tpu_custom_call.1
$region0: #{tpu_custom_call.1}
  #allocation0 [shape = 'u32[]', space=smem, size = 0x4, offset = 0x4, fixed_abs, tag = 'smem constant byte address 0x4 - core index']
  #allocation1 [shape = 'u32[144,128]{1,0:T(1,128)}', space=vmem, size = 0x12000, scoped, tag = 'internal scratch']
  %s0 = inlined_call_operand.vmem [shape: f32[512,64], index: 0, kind: input, shape index: {}]
  %s1 = inlined_call_operand.vmem [shape: f32[64,128], index: 1, kind: input, shape index: {}]
  %s2 = inlined_call_operand.hbm [shape: f32[512,128], index: 2, kind: output, shape index: {}]
  %s3 = sld [smem:[#allocation0]]
  $region41: #{tpu_custom_call.1} parent=0
    _
  %s5 = ssub.s32 1, %s3
  %s6 = scalar_select 0, %s5, %s3
  $region1: #{tpu_custom_call.1} parent=0
    #allocation2 [shape = 'u8[262144]{0}', space=vmem, size = 0x40000, scoped, tag = 'output window, operand 0']
    #allocation3 [shape = 's32[2]{0}', space=sflag, size = 0x8, scoped, tag = 'scoped memory for tpu_custom_call.1']
    %7 = vsyncpa [#allocation3], 0
    %s8 = scalar_lea.sflag [#allocation3], 1
    %9 = vsyncpa %s8, 0
    loop: start=0, step=1, limit=4
    $region2: #{tpu_custom_call.1} parent=1 // loop_pre_header
      _
    $region3: #{tpu_custom_call.1} parent=1 // loop_header
      %s11 = sphi 0, %s15
      %p12 = scmp.ge.s32.totalorder %s11, 4
      %s21 = sphi 0, %s23
      %s24 = sphi 0, %s21
      %s25 = sphi 0, %s24
      %s41 = sphi 0, %s25
      %s45 = sphi 0, %s45
      %s47 = sphi 0, %s45
      %s48 = sphi 0, %s47
      %s62 = sphi 0, %s48
      %s68 = sphi 0, %s70
      %s71 = sphi 0, %s68
      %s72 = sphi 0, %s71
      %s88 = sphi 0, %s72
    $region4: #{tpu_custom_call.1} parent=1 // loop_header_branch
      %14 = sbr.rel (%p12) target = $region8
    $region5: #{tpu_custom_call.1} parent=1 // loop_body
      %s16 = ssub.s32 %s11, 1
      %s17 = ssub.s32 %s11, 2
      %s18 = sadd.s32 %s11, 1
      %s19 = ssub.s32 %s11, %s18
      %p20 = scmp.eq.s32.totalorder %s19, 0
      %s22 = sadd.s32 %s21, 1
      %s23 = scalar_select %p20, %s21, %s22
      %p26 = pneg %p20
      %p27 = scmp.eq.s32.totalorder %s11, 1
      %p28 = por %p26, %p27
      %p29 = scmp.ne.s32.totalorder %s21, %s24
      %p30 = scmp.eq.s32.totalorder %s11, 0
      %p31 = por %p29, %p30
      %p32 = scmp.ne.s32.totalorder %s21, %s24
      %p33 = scmp.eq.s32.totalorder %s16, 1
      %p34 = por %p32, %p33
      %p35 = scmp.ne.s32.totalorder %s24, %s25
      %p36 = scmp.eq.s32.totalorder %s16, 0
      %p37 = por %p35, %p36
      %p38 = scmp.ne.s32.totalorder %s24, %s25
      %p39 = scmp.eq.s32.totalorder %s17, 1
      %p40 = por %p38, %p39
      %p42 = scmp.ne.s32.totalorder %s25, %s41
      %p43 = scmp.eq.s32.totalorder %s17, 0
      %p44 = por %p42, %p43
      %s46 = sadd.s32 %s45, 1
      %p49 = scmp.eq.s32.totalorder %s11, 1
      %p50 = scmp.ne.s32.totalorder %s45, %s47
      %p51 = scmp.eq.s32.totalorder %s11, 0
      %p52 = por %p50, %p51
      %p53 = scmp.ne.s32.totalorder %s45, %s47
      %p54 = scmp.eq.s32.totalorder %s16, 1
      %p55 = por %p53, %p54
      %p56 = scmp.ne.s32.totalorder %s47, %s48
      %p57 = scmp.eq.s32.totalorder %s16, 0
      %p58 = por %p56, %p57
      %p59 = scmp.ne.s32.totalorder %s47, %s48
      %p60 = scmp.eq.s32.totalorder %s17, 1
      %p61 = por %p59, %p60
      %p63 = scmp.ne.s32.totalorder %s48, %s62
      %p64 = scmp.eq.s32.totalorder %s17, 0
      %p65 = por %p63, %p64
      %s66 = ssub.s32 %s11, %s18
      %p67 = scmp.eq.s32.totalorder %s66, 0
      %s69 = sadd.s32 %s68, 1
      %s70 = scalar_select %p67, %s68, %s69
      %p73 = pneg %p67
      %p74 = scmp.eq.s32.totalorder %s11, 1
      %p75 = por %p73, %p74
      %p76 = scmp.ne.s32.totalorder %s68, %s71
      %p77 = scmp.eq.s32.totalorder %s11, 0
      %p78 = por %p76, %p77
      %p79 = scmp.ne.s32.totalorder %s68, %s71
      %p80 = scmp.eq.s32.totalorder %s16, 1
      %p81 = por %p79, %p80
      %p82 = scmp.ne.s32.totalorder %s71, %s72
      %p83 = scmp.eq.s32.totalorder %s16, 0
      %p84 = por %p82, %p83
      %p85 = scmp.ne.s32.totalorder %s71, %s72
      %p86 = scmp.eq.s32.totalorder %s17, 1
      %p87 = por %p85, %p86
      %p89 = scmp.ne.s32.totalorder %s72, %s88
      %p90 = scmp.eq.s32.totalorder %s17, 0
      %p91 = por %p89, %p90
      %p92 = scmp.le.s32.totalorder 1, %s11
      %p93 = scmp.lt.s32.totalorder %s11, 3
      %p94 = pnand %p92, %p93
      %p95 = pneg %p94
      // Predicated region
      $region9: #{tpu_custom_call.1} parent=5 // pred_check
        _
      $region10: #{tpu_custom_call.1} parent=5 // pred_check_branch
        %97 = sbr.rel (%p94) target = $region12
      $region11: #{tpu_custom_call.1} parent=5 // pred_region
        %s98 = ssub.s32 %s11, 1
        // Predicated region
        $region13: #{tpu_custom_call.1} parent=11 // pred_check
          %p99 = pneg %p58
        $region14: #{tpu_custom_call.1} parent=11 // pred_check_branch
          %101 = sbr.rel (%p99) target = $region16
        $region15: #{tpu_custom_call.1} parent=11 // pred_region
          _
        $region16: #{tpu_custom_call.1} parent=11 // pred_fallthru
          _
      $region12: #{tpu_custom_call.1} parent=5 // pred_fallthru
        _
      %p102 = scmp.lt.s32.totalorder %s11, 2
      // Predicated region
      $region17: #{tpu_custom_call.1} parent=5 // pred_check
        %p103 = pneg %p102
      $region18: #{tpu_custom_call.1} parent=5 // pred_check_branch
        %105 = sbr.rel (%p103) target = $region20
      $region19: #{tpu_custom_call.1} parent=5 // pred_region
        // Predicated region
        $region21: #{tpu_custom_call.1} parent=19 // pred_check
          %p106 = pneg %p31
        $region22: #{tpu_custom_call.1} parent=19 // pred_check_branch
          %108 = sbr.rel (%p106) target = $region24
        $region23: #{tpu_custom_call.1} parent=19 // pred_region
          %s109 = smul.u32 32, %s11
          %p110 = scmp.lt.s32.totalorder %s109, 63
          %s111 = scalar_select %p110, %s109, 63
          %s112 = smul.addr %s111, 8
          %s113 = scalar_lea.vmem %s0, %s112
          %s114 = smul.u32 32, %s11
        $region24: #{tpu_custom_call.1} parent=19 // pred_fallthru
          _
      $region20: #{tpu_custom_call.1} parent=5 // pred_fallthru
        _
      %p115 = scmp.le.s32.totalorder 1, %s11
      %p116 = scmp.lt.s32.totalorder %s11, 3
      %p117 = pnand %p115, %p116
      %p118 = pneg %p117
      // Predicated region
      $region25: #{tpu_custom_call.1} parent=5 // pred_check
        _
      $region26: #{tpu_custom_call.1} parent=5 // pred_check_branch
        %120 = sbr.rel (%p117) target = $region28
      $region27: #{tpu_custom_call.1} parent=5 // pred_region
        %s121 = ssub.s32 %s11, 1
        %s122 = smul.u32 32, %s16
        %p123 = scmp.lt.s32.totalorder %s122, 63
        %s124 = scalar_select %p123, %s122, 63
        %s125 = smul.addr %s124, 8
        %s126 = scalar_lea.vmem %s0, %s125
        %p127 = pneg %p37
        %p128 = pneg %p34
        %p129 = pneg %p58
        %p130 = pneg %p55
        %p131 = pneg %p84
        %p132 = pneg %p81
        %s133 = sand.u32 %s71, 1
        %s134 = scalar_lea.sflag [#allocation3], %s133
        %s135 = sand.u32 %s71, 1
        %s136 = smul.addr %s135, 256
        %s137 = scalar_lea.vmem [#allocation2], %s136
        %s138 = smul.u32 32, %s16
        %p139 = scmp.lt.s32.totalorder %s138, 63
        %s140 = scalar_select %p139, %s138, 63
        %s141 = smul.addr %s140, 8
        %s142 = scalar_lea.vmem %s0, %s141
        %s143 = smul.u32 32, %s16
        %s144 = smul.u32 32, %s16
        %v145 = vld [vmem:[%s142] sm:$0xff]
        %v146 = vld [vmem:[%s142 + $0x8] sm:$0xff]
        %v147 = vld [vmem:[%s142 + $0x10] sm:$0xff]
        %v148 = vld [vmem:[%s142 + $0x18] sm:$0xff]
        %v149 = vld [vmem:[%s142 + $0x20] sm:$0xff]
        %v150 = vld [vmem:[%s142 + $0x28] sm:$0xff]
        %v151 = vld [vmem:[%s142 + $0x30] sm:$0xff]
        %v152 = vld [vmem:[%s142 + $0x38] sm:$0xff]
        %v153 = vld [vmem:[%s142 + $0x40] sm:$0xff]
        %v154 = vld [vmem:[%s142 + $0x48] sm:$0xff]
        %v155 = vld [vmem:[%s142 + $0x50] sm:$0xff]
        %v156 = vld [vmem:[%s142 + $0x58] sm:$0xff]
        %v157 = vld [vmem:[%s142 + $0x60] sm:$0xff]
        %v158 = vld [vmem:[%s142 + $0x68] sm:$0xff]
        %v159 = vld [vmem:[%s142 + $0x70] sm:$0xff]
        %v160 = vld [vmem:[%s142 + $0x78] sm:$0xff]
        %v161 = vld [vmem:[%s142 + $0x80] sm:$0xff]
        %v162 = vld [vmem:[%s142 + $0x88] sm:$0xff]
        %v163 = vld [vmem:[%s142 + $0x90] sm:$0xff]
        %v164 = vld [vmem:[%s142 + $0x98] sm:$0xff]
        %v165 = vld [vmem:[%s142 + $0xa0] sm:$0xff]
        %v166 = vld [vmem:[%s142 + $0xa8] sm:$0xff]
        %v167 = vld [vmem:[%s142 + $0xb0] sm:$0xff]
        %v168 = vld [vmem:[%s142 + $0xb8] sm:$0xff]
        %v169 = vld [vmem:[%s142 + $0xc0] sm:$0xff]
        %v170 = vld [vmem:[%s142 + $0xc8] sm:$0xff]
        %v171 = vld [vmem:[%s142 + $0xd0] sm:$0xff]
        %v172 = vld [vmem:[%s142 + $0xd8] sm:$0xff]
        %v173 = vld [vmem:[%s142 + $0xe0] sm:$0xff]
        %v174 = vld [vmem:[%s142 + $0xe8] sm:$0xff]
        %v175 = vld [vmem:[%s142 + $0xf0] sm:$0xff]
        %v176 = vld [vmem:[%s142 + $0xf8] sm:$0xff]
        %v177 = vld [vmem:[%s1] sm:$0xff]
        %v178 = vld [vmem:[%s1 + $0x8] sm:$0xff]
        %v179 = vld [vmem:[%s1 + $0x10] sm:$0xff]
        %v180 = vld [vmem:[%s1 + $0x18] sm:$0xff]
        %v181 = vld [vmem:[%s1 + $0x20] sm:$0xff]
        %v182 = vld [vmem:[%s1 + $0x28] sm:$0xff]
        %v183 = vld [vmem:[%s1 + $0x30] sm:$0xff]
        %v184 = vld [vmem:[%s1 + $0x38] sm:$0xff]
        %vm185 = vcmask 523264
        %v187 = vsel %vm185, %v145, 0
        %v190 = vsel %vm185, %v146, 0
        %v193 = vsel %vm185, %v147, 0
        %v196 = vsel %vm185, %v148, 0
        %v199 = vsel %vm185, %v149, 0
        %v202 = vsel %vm185, %v150, 0
        %v205 = vsel %vm185, %v151, 0
        %v208 = vsel %vm185, %v152, 0
        %v211 = vsel %vm185, %v153, 0
        %v214 = vsel %vm185, %v154, 0
        %v217 = vsel %vm185, %v155, 0
        %v220 = vsel %vm185, %v156, 0
        %v223 = vsel %vm185, %v157, 0
        %v226 = vsel %vm185, %v158, 0
        %v229 = vsel %vm185, %v159, 0
        %v232 = vsel %vm185, %v160, 0
        %v235 = vsel %vm185, %v161, 0
        %v238 = vsel %vm185, %v162, 0
        %v241 = vsel %vm185, %v163, 0
        %v244 = vsel %vm185, %v164, 0
        %v247 = vsel %vm185, %v165, 0
        %v250 = vsel %vm185, %v166, 0
        %v253 = vsel %vm185, %v167, 0
        %v256 = vsel %vm185, %v168, 0
        %v259 = vsel %vm185, %v169, 0
        %v262 = vsel %vm185, %v170, 0
        %v265 = vsel %vm185, %v171, 0
        %v268 = vsel %vm185, %v172, 0
        %v271 = vsel %vm185, %v173, 0
        %v274 = vsel %vm185, %v174, 0
        %v277 = vsel %vm185, %v175, 0
        %v280 = vsel %vm185, %v176, 0
        %282 = vmatprep.subr.mxu0 0.0
        %283 = vmatpush1.msra.mxu0 %v177
        %284 = vmatprep.subr.mxu0 0.0
        %285 = vmatpush1.msra.mxu0 %v178
        %286 = vmatprep.subr.mxu0 0.0
        %287 = vmatpush1.msra.mxu0 %v179
        %288 = vmatprep.subr.mxu0 0.0
        %289 = vmatpush1.msra.mxu0 %v180
        %290 = vmatprep.subr.mxu0 0.0
        %291 = vmatpush1.msra.mxu0 %v181
        %292 = vmatprep.subr.mxu0 0.0
        %293 = vmatpush1.msra.mxu0 %v182
        %294 = vmatprep.subr.mxu0 0.0
        %295 = vmatpush1.msra.mxu0 %v183
        %296 = vmatprep.subr.mxu0 0.0
        %297 = vmatpush1.msra.mxu0 %v184
        %298 = vmatprep.subr.mxu0 0.0
        %299 = vmatpush1.msra.mxu0 0.0
        %300 = vmatprep.subr.mxu0 0.0
        %301 = vmatpush1.msra.mxu0 0.0
        %302 = vmatprep.subr.mxu0 0.0
        %303 = vmatpush1.msra.mxu0 0.0
        %304 = vmatprep.subr.mxu0 0.0
        %305 = vmatpush1.msra.mxu0 0.0
        %306 = vmatprep.subr.mxu0 0.0
        %307 = vmatpush1.msra.mxu0 0.0
        %308 = vmatprep.subr.mxu0 0.0
        %309 = vmatpush1.msra.mxu0 0.0
        %310 = vmatprep.subr.mxu0 0.0
        %311 = vmatpush1.msra.mxu0 0.0
        %312 = vmatprep.subr.mxu0 0.0
        %313 = vmatpush1.msra.mxu0 0.0
        %314 = vmatprep.subr.mxu0 0.0
        %315 = vmatpush1.msra.mxu0 0.0
        %316 = vmatprep.subr.mxu0 0.0
        %317 = vmatpush1.msra.mxu0 0.0
        %318 = vmatprep.subr.mxu0 0.0
        %319 = vmatpush1.msra.mxu0 0.0
        %320 = vmatprep.subr.mxu0 0.0
        %321 = vmatpush1.msra.mxu0 0.0
        %322 = vmatprep.subr.mxu0 0.0
        %323 = vmatpush1.msra.mxu0 0.0
        %324 = vmatprep.subr.mxu0 0.0
        %325 = vmatpush1.msra.mxu0 0.0
        %326 = vmatprep.subr.mxu0 0.0
        %327 = vmatpush1.msra.mxu0 0.0
        %328 = vmatprep.subr.mxu0 0.0
        %329 = vmatpush1.msra.mxu0 0.0
        %330 = vmatprep.subr.mxu0 0.0
        %331 = vmatpush1.msra.mxu0 0.0
        %332 = vmatprep.subr.mxu0 0.0
        %333 = vmatpush1.msra.mxu0 0.0
        %334 = vmatprep.subr.mxu0 0.0
        %335 = vmatpush1.msra.mxu0 0.0
        %336 = vmatprep.subr.mxu0 0.0
        %337 = vmatpush1.msra.mxu0 0.0
        %338 = vmatprep.subr.mxu0 0.0
        %339 = vmatpush1.msra.mxu0 0.0
        %340 = vmatprep.subr.mxu0 0.0
        %341 = vmatpush1.msra.mxu0 0.0
        %342 = vmatprep.subr.mxu0 0.0
        %343 = vmatpush1.msra.mxu0 0.0
        %344 = vmatprep.subr.mxu0 0.0
        %345 = vmatpush1.msra.mxu0 0.0
        %346 = vmatprep.mubr.f32.mxu0 0.0
        %347 = vmatmul.mubr.f32.gmra.mrb[0].mxu0 %v187
        %v348 = vpop.f32.mrb[0].mxu0
        %v349 = vadd.f32 0.0, %v348
        %v350 = vpop.f32.mrb[0].mxu0
        %351 = vmatprep.mubr.f32.mxu0 0.0
        %352 = vmatmul.mubr.f32.gmra.mrb[0].mxu0 %v190
        %v353 = vpop.f32.mrb[0].mxu0
        %v354 = vadd.f32 0.0, %v353
        %v355 = vpop.f32.mrb[0].mxu0
        %356 = vmatprep.mubr.f32.mxu0 0.0
        %357 = vmatmul.mubr.f32.gmra.mrb[0].mxu0 %v193
        %v358 = vpop.f32.mrb[0].mxu0
        %v359 = vadd.f32 0.0, %v358
        %v360 = vpop.f32.mrb[0].mxu0
        %361 = vmatprep.mubr.f32.mxu0 0.0
        %362 = vmatmul.mubr.f32.gmra.mrb[0].mxu0 %v196
        %v363 = vpop.f32.mrb[0].mxu0
        %v364 = vadd.f32 0.0, %v363
        %v365 = vpop.f32.mrb[0].mxu0
        %366 = vmatprep.mubr.f32.mxu0 0.0
        %367 = vmatmul.mubr.f32.gmra.mrb[0].mxu0 %v199
        %v368 = vpop.f32.mrb[0].mxu0
        %v369 = vadd.f32 0.0, %v368
        %v370 = vpop.f32.mrb[0].mxu0
        %371 = vmatprep.mubr.f32.mxu0 0.0
        %372 = vmatmul.mubr.f32.gmra.mrb[0].mxu0 %v202
        %v373 = vpop.f32.mrb[0].mxu0
        %v374 = vadd.f32 0.0, %v373
        %v375 = vpop.f32.mrb[0].mxu0
        %376 = vmatprep.mubr.f32.mxu0 0.0
        %377 = vmatmul.mubr.f32.gmra.mrb[0].mxu0 %v205
        %v378 = vpop.f32.mrb[0].mxu0
        %v379 = vadd.f32 0.0, %v378
        %v380 = vpop.f32.mrb[0].mxu0
        %381 = vmatprep.mubr.f32.mxu0 0.0
        %382 = vmatmul.mubr.f32.gmra.mrb[0].mxu0 %v208
        %v383 = vpop.f32.mrb[0].mxu0
        %v384 = vadd.f32 0.0, %v383
        %v385 = vpop.f32.mrb[0].mxu0
        %386 = vmatprep.mubr.f32.mxu0 0.0
        %387 = vmatmul.mubr.f32.gmra.mrb[0].mxu0 %v211
        %v388 = vpop.f32.mrb[0].mxu0
        %v389 = vadd.f32 0.0, %v388
        %v390 = vpop.f32.mrb[0].mxu0
        %391 = vmatprep.mubr.f32.mxu0 0.0
        %392 = vmatmul.mubr.f32.gmra.mrb[0].mxu0 %v214
        %v393 = vpop.f32.mrb[0].mxu0
        %v394 = vadd.f32 0.0, %v393
        %v395 = vpop.f32.mrb[0].mxu0
        %396 = vmatprep.mubr.f32.mxu0 0.0
        %397 = vmatmul.mubr.f32.gmra.mrb[0].mxu0 %v217
        %v398 = vpop.f32.mrb[0].mxu0
        %v399 = vadd.f32 0.0, %v398
        %v400 = vpop.f32.mrb[0].mxu0
        %401 = vmatprep.mubr.f32.mxu0 0.0
        %402 = vmatmul.mubr.f32.gmra.mrb[0].mxu0 %v220
        %v403 = vpop.f32.mrb[0].mxu0
        %v404 = vadd.f32 0.0, %v403
        %v405 = vpop.f32.mrb[0].mxu0
        %406 = vmatprep.mubr.f32.mxu0 0.0
        %407 = vmatmul.mubr.f32.gmra.mrb[0].mxu0 %v223
        %v408 = vpop.f32.mrb[0].mxu0
        %v409 = vadd.f32 0.0, %v408
        %v410 = vpop.f32.mrb[0].mxu0
        %411 = vmatprep.mubr.f32.mxu0 0.0
        %412 = vmatmul.mubr.f32.gmra.mrb[0].mxu0 %v226
        %v413 = vpop.f32.mrb[0].mxu0
        %v414 = vadd.f32 0.0, %v413
        %v415 = vpop.f32.mrb[0].mxu0
        %416 = vmatprep.mubr.f32.mxu0 0.0
        %417 = vmatmul.mubr.f32.gmra.mrb[0].mxu0 %v229
        %v418 = vpop.f32.mrb[0].mxu0
        %v419 = vadd.f32 0.0, %v418
        %v420 = vpop.f32.mrb[0].mxu0
        %421 = vmatprep.mubr.f32.mxu0 0.0
        %422 = vmatmul.mubr.f32.gmra.mrb[0].mxu0 %v232
        %v423 = vpop.f32.mrb[0].mxu0
        %v424 = vadd.f32 0.0, %v423
        %v425 = vpop.f32.mrb[0].mxu0
        %426 = vmatprep.mubr.f32.mxu0 0.0
        %427 = vmatmul.mubr.f32.gmra.mrb[0].mxu0 %v235
        %v428 = vpop.f32.mrb[0].mxu0
        %v429 = vadd.f32 0.0, %v428
        %v430 = vpop.f32.mrb[0].mxu0
        %431 = vmatprep.mubr.f32.mxu0 0.0
        %432 = vmatmul.mubr.f32.gmra.mrb[0].mxu0 %v238
        %v433 = vpop.f32.mrb[0].mxu0
        %v434 = vadd.f32 0.0, %v433
        %v435 = vpop.f32.mrb[0].mxu0
        %436 = vmatprep.mubr.f32.mxu0 0.0
        %437 = vmatmul.mubr.f32.gmra.mrb[0].mxu0 %v241
        %v438 = vpop.f32.mrb[0].mxu0
        %v439 = vadd.f32 0.0, %v438
        %v440 = vpop.f32.mrb[0].mxu0
        %441 = vmatprep.mubr.f32.mxu0 0.0
        %442 = vmatmul.mubr.f32.gmra.mrb[0].mxu0 %v244
        %v443 = vpop.f32.mrb[0].mxu0
        %v444 = vadd.f32 0.0, %v443
        %v445 = vpop.f32.mrb[0].mxu0
        %446 = vmatprep.mubr.f32.mxu0 0.0
        %447 = vmatmul.mubr.f32.gmra.mrb[0].mxu0 %v247
        %v448 = vpop.f32.mrb[0].mxu0
        %v449 = vadd.f32 0.0, %v448
        %v450 = vpop.f32.mrb[0].mxu0
        %451 = vmatprep.mubr.f32.mxu0 0.0
        %452 = vmatmul.mubr.f32.gmra.mrb[0].mxu0 %v250
        %v453 = vpop.f32.mrb[0].mxu0
        %v454 = vadd.f32 0.0, %v453
        %v455 = vpop.f32.mrb[0].mxu0
        %456 = vmatprep.mubr.f32.mxu0 0.0
        %457 = vmatmul.mubr.f32.gmra.mrb[0].mxu0 %v253
        %v458 = vpop.f32.mrb[0].mxu0
        %v459 = vadd.f32 0.0, %v458
        %v460 = vpop.f32.mrb[0].mxu0
        %461 = vmatprep.mubr.f32.mxu0 0.0
        %462 = vmatmul.mubr.f32.gmra.mrb[0].mxu0 %v256
        %v463 = vpop.f32.mrb[0].mxu0
        %v464 = vadd.f32 0.0, %v463
        %v465 = vpop.f32.mrb[0].mxu0
        %466 = vmatprep.mubr.f32.mxu0 0.0
        %467 = vmatmul.mubr.f32.gmra.mrb[0].mxu0 %v259
        %v468 = vpop.f32.mrb[0].mxu0
        %v469 = vadd.f32 0.0, %v468
        %v470 = vpop.f32.mrb[0].mxu0
        %471 = vmatprep.mubr.f32.mxu0 0.0
        %472 = vmatmul.mubr.f32.gmra.mrb[0].mxu0 %v262
        %v473 = vpop.f32.mrb[0].mxu0
        %v474 = vadd.f32 0.0, %v473
        %v475 = vpop.f32.mrb[0].mxu0
        %476 = vmatprep.mubr.f32.mxu0 0.0
        %477 = vmatmul.mubr.f32.gmra.mrb[0].mxu0 %v265
        %v478 = vpop.f32.mrb[0].mxu0
        %v479 = vadd.f32 0.0, %v478
        %v480 = vpop.f32.mrb[0].mxu0
        %481 = vmatprep.mubr.f32.mxu0 0.0
        %482 = vmatmul.mubr.f32.gmra.mrb[0].mxu0 %v268
        %v483 = vpop.f32.mrb[0].mxu0
        %v484 = vadd.f32 0.0, %v483
        %v485 = vpop.f32.mrb[0].mxu0
        %486 = vmatprep.mubr.f32.mxu0 0.0
        %487 = vmatmul.mubr.f32.gmra.mrb[0].mxu0 %v271
        %v488 = vpop.f32.mrb[0].mxu0
        %v489 = vadd.f32 0.0, %v488
        %v490 = vpop.f32.mrb[0].mxu0
        %491 = vmatprep.mubr.f32.mxu0 0.0
        %492 = vmatmul.mubr.f32.gmra.mrb[0].mxu0 %v274
        %v493 = vpop.f32.mrb[0].mxu0
        %v494 = vadd.f32 0.0, %v493
        %v495 = vpop.f32.mrb[0].mxu0
        %496 = vmatprep.mubr.f32.mxu0 0.0
        %497 = vmatmul.mubr.f32.gmra.mrb[0].mxu0 %v277
        %v498 = vpop.f32.mrb[0].mxu0
        %v499 = vadd.f32 0.0, %v498
        %v500 = vpop.f32.mrb[0].mxu0
        %501 = vmatprep.mubr.f32.mxu0 0.0
        %502 = vmatmul.mubr.f32.gmra.mrb[0].mxu0 %v280
        %v503 = vpop.f32.mrb[0].mxu0
        %v504 = vadd.f32 0.0, %v503
        %v505 = vpop.f32.mrb[0].mxu0
        %506 = vdwg.mxu0
        %507 = vst [vmem:[%s137] sm:$0xff] %v349
        %508 = vst [vmem:[%s137 + $0x8] sm:$0xff] %v354
        %509 = vst [vmem:[%s137 + $0x10] sm:$0xff] %v359
        %510 = vst [vmem:[%s137 + $0x18] sm:$0xff] %v364
        %511 = vst [vmem:[%s137 + $0x20] sm:$0xff] %v369
        %512 = vst [vmem:[%s137 + $0x28] sm:$0xff] %v374
        %513 = vst [vmem:[%s137 + $0x30] sm:$0xff] %v379
        %514 = vst [vmem:[%s137 + $0x38] sm:$0xff] %v384
        %515 = vst [vmem:[%s137 + $0x40] sm:$0xff] %v389
        %516 = vst [vmem:[%s137 + $0x48] sm:$0xff] %v394
        %517 = vst [vmem:[%s137 + $0x50] sm:$0xff] %v399
        %518 = vst [vmem:[%s137 + $0x58] sm:$0xff] %v404
        %519 = vst [vmem:[%s137 + $0x60] sm:$0xff] %v409
        %520 = vst [vmem:[%s137 + $0x68] sm:$0xff] %v414
        %521 = vst [vmem:[%s137 + $0x70] sm:$0xff] %v419
        %522 = vst [vmem:[%s137 + $0x78] sm:$0xff] %v424
        %523 = vst [vmem:[%s137 + $0x80] sm:$0xff] %v429
        %524 = vst [vmem:[%s137 + $0x88] sm:$0xff] %v434
        %525 = vst [vmem:[%s137 + $0x90] sm:$0xff] %v439
        %526 = vst [vmem:[%s137 + $0x98] sm:$0xff] %v444
        %527 = vst [vmem:[%s137 + $0xa0] sm:$0xff] %v449
        %528 = vst [vmem:[%s137 + $0xa8] sm:$0xff] %v454
        %529 = vst [vmem:[%s137 + $0xb0] sm:$0xff] %v459
        %530 = vst [vmem:[%s137 + $0xb8] sm:$0xff] %v464
        %531 = vst [vmem:[%s137 + $0xc0] sm:$0xff] %v469
        %532 = vst [vmem:[%s137 + $0xc8] sm:$0xff] %v474
        %533 = vst [vmem:[%s137 + $0xd0] sm:$0xff] %v479
        %534 = vst [vmem:[%s137 + $0xd8] sm:$0xff] %v484
        %535 = vst [vmem:[%s137 + $0xe0] sm:$0xff] %v489
        %536 = vst [vmem:[%s137 + $0xe8] sm:$0xff] %v494
        %537 = vst [vmem:[%s137 + $0xf0] sm:$0xff] %v499
        %538 = vst [vmem:[%s137 + $0xf8] sm:$0xff] %v504
        %s539 = sand.u32 %s71, 1
        %s540 = scalar_lea.sflag [#allocation3], %s539
        %s541 = sand.u32 %s71, 1
        %s542 = smul.addr %s541, 256
        %s543 = scalar_lea.vmem [#allocation2], %s542
        // Predicated region
        $region29: #{tpu_custom_call.1} parent=27 // pred_check
          %p544 = pneg %p81
        $region30: #{tpu_custom_call.1} parent=27 // pred_check_branch
          %546 = sbr.rel (%p544) target = $region32
        $region31: #{tpu_custom_call.1} parent=27 // pred_region
          %s547 = smul.u32 32, %s16
          %s549 = ssub.s32 4096, 4096
          %550 = vsyncadd %s540, %s549
          %s551 = smul.addr %s547, 128
          %s552 = scalar_lea.hbm %s2, %s551
          %s553 = sshll.u32 %s543, 4
          %s554 = int_to_ptr.vmem [resolvable:$true] %s553
          %559 = dma.vmem_to_hbm [thread:$0]  %s554, 4096, %s552, %s540, 128, 128, 8
        $region32: #{tpu_custom_call.1} parent=27 // pred_fallthru
          _
      $region28: #{tpu_custom_call.1} parent=5 // pred_fallthru
        _
      %p560 = scmp.le.s32.totalorder 2, %s11
      // Predicated region
      $region33: #{tpu_custom_call.1} parent=5 // pred_check
        %p561 = pneg %p560
      $region34: #{tpu_custom_call.1} parent=5 // pred_check_branch
        %563 = sbr.rel (%p561) target = $region36
      $region35: #{tpu_custom_call.1} parent=5 // pred_region
        %s564 = ssub.s32 %s11, 2
        // Predicated region
        $region37: #{tpu_custom_call.1} parent=35 // pred_check
          %p565 = pneg %p87
        $region38: #{tpu_custom_call.1} parent=35 // pred_check_branch
          %567 = sbr.rel (%p565) target = $region40
        $region39: #{tpu_custom_call.1} parent=35 // pred_region
          %s568 = sand.u32 %s72, 1
          %s569 = scalar_lea.sflag [#allocation3], %s568
          %s570 = sand.u32 %s72, 1
          %s571 = smul.addr %s570, 256
          %s572 = scalar_lea.vmem [#allocation2], %s571
          %573 = dma.done %s569, 4096
        $region40: #{tpu_custom_call.1} parent=35 // pred_fallthru
          _
      $region36: #{tpu_custom_call.1} parent=5 // pred_fallthru
        _
    $region6: #{tpu_custom_call.1} parent=1 // loop_footer
      %s15 = sadd.s32 1, %s11
    $region7: #{tpu_custom_call.1} parent=1 // loop_footer_branch
      %10 = sbr.rel target = $region3
    $region8: #{tpu_custom_call.1} parent=1 // loop_exit
      _
    %574 = vsyncpa [#allocation3], 1
    %s575 = scalar_lea.sflag [#allocation3], 1
    %576 = vsyncpa %s575, 1

</llo_original>
